<compile_context>
chip_gen: v5e
topology: v5e:2x2
jax: 0.10.0
libtpu: 0.0.40
codegen_flags: <defaults>
</compile_context>

<pallas_src>
import jax
import jax.numpy as jnp
from jax.experimental import pallas as pl
from jax.experimental.pallas import tpu as pltpu

EPS = 1e-5
MASK_WITH = -1e10


def _stgcn_kernel(mask_ref, adj_ref, x_ref, wt_ref, feat_ref, adj_out_ref):
    # mask_ref : (Bb, 1, TN)
    # adj_ref  : (Bb, TN, TN)
    # x_ref    : (Bb, TN, D)
    # wt_ref   : (D, D)   -- already W^T (hoisted transpose), so support = x @ wt
    bb, tn, d = x_ref.shape

    mask = mask_ref[...]                     # (Bb, 1, TN)
    adj = adj_ref[...]                       # (Bb, TN, TN)
    x = x_ref[...]                           # (Bb, TN, D)
    w_t = wt_ref[...]                        # (D, D)

    # masked_fill(node_mask == 0, -1e10)  (mask broadcasts over rows -> masks columns)
    adj_m = jnp.where(mask == 0.0, MASK_WITH, adj)

    # softmax over last dim (EUP approx reciprocal for the denominator)
    m = jnp.max(adj_m, axis=-1, keepdims=True)
    e = jnp.exp(adj_m - m)
    s = jnp.sum(e, axis=-1, keepdims=True)
    a = e * pl.reciprocal(s, approx=True)
    # masked_fill(adj != adj, 0.0) -- kept for parity with the PyTorch reference
    a = jnp.where(a != a, 0.0, a)

    # GraphConvolution Linear over ALL Bb*TN rows in one MXU matmul.
    x2 = x.reshape(bb * tn, d)
    support = jnp.dot(x2, w_t, preferred_element_type=jnp.float32).reshape(bb, tn, d)

    # output = adj @ support  (batched)
    out = jnp.einsum('bij,bjd->bid', a, support,
                     preferred_element_type=jnp.float32)       # (Bb, TN, D)

    inv_d = jnp.float32(1.0 / d)

    # LayerNorm (no affine) over D
    mu1 = jnp.sum(out, axis=-1, keepdims=True) * inv_d
    c1 = out - mu1
    var1 = jnp.sum(c1 * c1, axis=-1, keepdims=True) * inv_d
    ln1 = c1 * jax.lax.rsqrt(var1 + EPS)

    # GCN: relu + residual + final LayerNorm (no affine)
    y = jnp.maximum(ln1, 0.0)
    z = x + y
    mu2 = jnp.sum(z, axis=-1, keepdims=True) * inv_d
    c2 = z - mu2
    var2 = jnp.sum(c2 * c2, axis=-1, keepdims=True) * inv_d
    feat_ref[...] = c2 * jax.lax.rsqrt(var2 + EPS)
    adj_out_ref[...] = a


def _pick_batch_block(B, TN, D, budget_bytes=10 * 1024 * 1024):
    """Largest batch block that fits a per-buffer VMEM budget, keeping >=2 grid steps."""
    per_b = (2 * TN * TN + 2 * TN * D + TN) * 4          # f32 bytes per batch element
    bb = max(1, min(B, budget_bytes // max(per_b, 1)))
    if B >= 2:
        # keep at least two grid steps so both v7x TensorCores can be used
        bb = min(bb, pl.cdiv(B, 2))
    return int(bb), per_b


def context_stgcn_forward(question_feature, glob_question_feature, question_mask,
                          object_feature, object_mask, spatial_graph, gcn_weight):
    """Pallas implementation of ContextSTGCN.forward (fixed graph, 1 head, no q2v).

    question_feature / glob_question_feature / question_mask are accepted for
    interface parity but unused on this code path (q2v_flag=False).
    """
    del question_feature, glob_question_feature, question_mask  # unused (q2v_flag=False)

    B, T, N, D = object_feature.shape
    TN = T * N
    obj = object_feature.reshape(B, TN, D).astype(jnp.float32)
    mask = object_mask.reshape(B, 1, TN).astype(jnp.float32)
    adj_in = spatial_graph.astype(jnp.float32)                     # (B, TN, TN)
    # Hoist the transpose: PyTorch Linear is y = x @ W^T, so pass W^T once.
    w_t = jnp.transpose(gcn_weight.astype(jnp.float32))            # (D_in, D_out)

    Bb, per_b = _pick_batch_block(B, TN, D)
    grid_b = pl.cdiv(B, Bb)

    # Only raise the scoped VMEM limit if the double-buffered working set needs it.
    block_bytes = 2 * Bb * per_b + 2 * D * D * 4
    compiler_kwargs = dict(dimension_semantics=("parallel",))
    if block_bytes > 24 * 1024 * 1024:
        compiler_kwargs["vmem_limit_bytes"] = int(min(block_bytes + (8 << 20), 100 << 20))

    cost = pl.CostEstimate(
        flops=int(2 * B * TN * D * D + 2 * B * TN * TN * D
                  + 8 * B * TN * D + 6 * B * TN * TN),
        transcendentals=int(B * TN * TN + 3 * B * TN),
        bytes_accessed=int(4 * (2 * B * TN * TN + 2 * B * TN * D + B * TN + D * D)),
    )

    feat, adj = pl.pallas_call(
        _stgcn_kernel,
        out_shape=(
            jax.ShapeDtypeStruct((B, TN, D), jnp.float32),
            jax.ShapeDtypeStruct((B, TN, TN), jnp.float32),
        ),
        grid_spec=pltpu.PrefetchScalarGridSpec(
            num_scalar_prefetch=0,
            grid=(grid_b,),
            in_specs=[
                pl.BlockSpec((Bb, 1, TN), lambda b: (b, 0, 0)),
                pl.BlockSpec((Bb, TN, TN), lambda b: (b, 0, 0)),
                pl.BlockSpec((Bb, TN, D), lambda b: (b, 0, 0)),
                pl.BlockSpec((D, D), lambda b: (0, 0)),
            ],
            out_specs=[
                pl.BlockSpec((Bb, TN, D), lambda b: (b, 0, 0)),
                pl.BlockSpec((Bb, TN, TN), lambda b: (b, 0, 0)),
            ],
        ),
        compiler_params=pltpu.CompilerParams(**compiler_kwargs),
        cost_estimate=cost,
    )(mask, adj_in, obj, w_t)

    object_feature_out = feat.reshape(B, T, N, D)
    spatial_adj = adj.reshape(B, 1, TN, TN)   # matches graph_adj returned by GCN_learner
    cross_adj = None
    temporal_adj = None
    return object_feature_out, cross_adj, spatial_adj, temporal_adj


if __name__ == "__main__":
    # Small shapes consistent with the module's forward signature.
    B, T, N, D, L = 2, 4, 4, 32, 8
    TN = T * N

    key = jax.random.PRNGKey(0)
    k_qf, k_gq, k_of, k_om, k_sg, k_w = jax.random.split(key, 6)

    question_feature = jax.random.normal(k_qf, (B, L, D), dtype=jnp.float32)
    glob_question_feature = jax.random.normal(k_gq, (B, D), dtype=jnp.float32)
    question_mask = jnp.ones((B, L), dtype=jnp.float32)
    object_feature = jax.random.normal(k_of, (B, T, N, D), dtype=jnp.float32)
    # binary object mask with at least one valid node per (b, t)
    object_mask = (jax.random.uniform(k_om, (B, T, N)) > 0.3).astype(jnp.float32)
    object_mask = object_mask.at[:, :, 0].set(1.0)
    spatial_graph = jax.random.normal(k_sg, (B, TN, TN), dtype=jnp.float32)

    # GraphConvolution Linear(D, D, bias=False) weight, PyTorch shape (out, in).
    gcn_weight = jax.random.normal(k_w, (D, D), dtype=jnp.float32) * 0.05

    feat, cross_adj, spatial_adj, temporal_adj = context_stgcn_forward(
        question_feature, glob_question_feature, question_mask,
        object_feature, object_mask, spatial_graph, gcn_weight)

    jax.block_until_ready(feat)
    jax.block_until_ready(spatial_adj)
    assert feat.shape == (B, T, N, D)
    assert spatial_adj.shape == (B, 1, TN, TN)
    assert bool(jnp.all(jnp.isfinite(feat)))
    assert bool(jnp.all(jnp.isfinite(spatial_adj)))
    print("KERNEL_OK")
</pallas_src>

<mosaic_0001>
module attributes {stable_mosaic.version = 11 : i64} {
  func.func @_stgcn_kernel(%arg0: i32, %arg1: memref<1x1x16xf32, #tpu.memory_space<vmem>>, %arg2: memref<1x16x16xf32, #tpu.memory_space<vmem>>, %arg3: memref<1x16x32xf32, #tpu.memory_space<vmem>>, %arg4: memref<32x32xf32, #tpu.memory_space<vmem>>, %arg5: memref<1x16x32xf32, #tpu.memory_space<vmem>>, %arg6: memref<1x16x16xf32, #tpu.memory_space<vmem>>) attributes {dimension_semantics = [#tpu.dimension_semantics<parallel>], iteration_bounds = array<i64: 2>, scalar_prefetch = 0 : i64, scratch_operands = 0 : i64, tpu.core_type = #tpu.core_type<tc>, window_params = [{transform_indices = @transform_0, window_bounds = array<i64: 1, 1, 16>}, {transform_indices = @transform_1, window_bounds = array<i64: 1, 16, 16>}, {transform_indices = @transform_2, window_bounds = array<i64: 1, 16, 32>}, {pipeline_mode = #tpu.pipeline_mode<synchronous>, transform_indices = @transform_3, window_bounds = array<i64: 32, 32>}, {transform_indices = @transform_4, window_bounds = array<i64: 1, 16, 32>}, {transform_indices = @transform_5, window_bounds = array<i64: 1, 16, 16>}]} {
    %c0 = arith.constant 0 : index
    %c0_0 = arith.constant 0 : index
    %c0_1 = arith.constant 0 : index
    %0 = vector.load %arg1[%c0, %c0_0, %c0_1] : memref<1x1x16xf32, #tpu.memory_space<vmem>>, vector<1x1x16xf32>
    %c0_2 = arith.constant 0 : index
    %c0_3 = arith.constant 0 : index
    %c0_4 = arith.constant 0 : index
    %1 = vector.load %arg2[%c0_2, %c0_3, %c0_4] : memref<1x16x16xf32, #tpu.memory_space<vmem>>, vector<1x16x16xf32>
    %c0_5 = arith.constant 0 : index
    %c0_6 = arith.constant 0 : index
    %c0_7 = arith.constant 0 : index
    %2 = vector.load %arg3[%c0_5, %c0_6, %c0_7] : memref<1x16x32xf32, #tpu.memory_space<vmem>>, vector<1x16x32xf32>
    %c0_8 = arith.constant 0 : index
    %c0_9 = arith.constant 0 : index
    %3 = vector.load %arg4[%c0_8, %c0_9] : memref<32x32xf32, #tpu.memory_space<vmem>>, vector<32x32xf32>
    %cst = arith.constant 0.000000e+00 : f32
    %4 = vector.broadcast %cst : f32 to vector<1x1x16xf32>
    %5 = arith.cmpf oeq, %0, %4 : vector<1x1x16xf32>
    %cst_10 = arith.constant -1.000000e+10 : f32
    %6 = vector.shape_cast %5 : vector<1x1x16xi1> to vector<1x1x16xi1>
    %7 = vector.broadcast %6 : vector<1x1x16xi1> to vector<1x16x16xi1>
    %8 = vector.broadcast %cst_10 : f32 to vector<1x16x16xf32>
    %9 = arith.select %7, %8, %1 : vector<1x16x16xi1>, vector<1x16x16xf32>
    %cst_11 = arith.constant dense<0xFF800000> : vector<1x16xf32>
    %10 = vector.multi_reduction <maximumf>, %9, %cst_11 [2] : vector<1x16x16xf32> to vector<1x16xf32>
    %11 = vector.shape_cast %10 : vector<1x16xf32> to vector<1x16x1xf32>
    %12 = vector.broadcast %11 : vector<1x16x1xf32> to vector<1x16x16xf32>
    %13 = arith.subf %9, %12 : vector<1x16x16xf32>
    %14 = math.exp %13 : vector<1x16x16xf32>
    %cst_12 = arith.constant dense<0.000000e+00> : vector<1x16xf32>
    %15 = vector.multi_reduction <add>, %14, %cst_12 [2] : vector<1x16x16xf32> to vector<1x16xf32>
    %16 = vector.shape_cast %15 : vector<1x16xf32> to vector<1x16x1xf32>
    %17 = tpu.reciprocal %16 {approx = true} : vector<1x16x1xf32> -> vector<1x16x1xf32>
    %18 = vector.broadcast %17 : vector<1x16x1xf32> to vector<1x16x16xf32>
    %19 = arith.mulf %14, %18 : vector<1x16x16xf32>
    %20 = arith.cmpf one, %19, %19 : vector<1x16x16xf32>
    %cst_13 = arith.constant 0.000000e+00 : f32
    %21 = vector.broadcast %cst_13 : f32 to vector<1x16x16xf32>
    %22 = arith.select %20, %21, %19 : vector<1x16x16xi1>, vector<1x16x16xf32>
    %23 = vector.shape_cast %2 : vector<1x16x32xf32> to vector<16x32xf32>
    %cst_14 = arith.constant dense<0.000000e+00> : vector<16x32xf32>
    %24 = tpu.matmul %23, %3, %cst_14 {dimension_numbers = #tpu.dot_dimension_numbers<[1], [0], [0], [1], [0, 0, 1, 1], [], []>} : vector<16x32xf32>, vector<32x32xf32>, vector<16x32xf32> -> vector<16x32xf32>
    %25 = vector.shape_cast %24 : vector<16x32xf32> to vector<1x16x32xf32>
    "tpu.trace_start"() <{level = 10 : i32, message = "bij,bjd->bid"}> : () -> ()
    %cst_15 = arith.constant dense<0.000000e+00> : vector<1x16x32xf32>
    %26 = tpu.matmul %22, %25, %cst_15 {dimension_numbers = #tpu.dot_dimension_numbers<[2], [1], [1], [2], [0, 0, 0, 1, 1, 2], [0], [0]>} : vector<1x16x16xf32>, vector<1x16x32xf32>, vector<1x16x32xf32> -> vector<1x16x32xf32>
    "tpu.trace_stop"() : () -> ()
    %cst_16 = arith.constant dense<0.000000e+00> : vector<1x16xf32>
    %27 = vector.multi_reduction <add>, %26, %cst_16 [2] : vector<1x16x32xf32> to vector<1x16xf32>
    %28 = vector.shape_cast %27 : vector<1x16xf32> to vector<1x16x1xf32>
    %cst_17 = arith.constant 3.125000e-02 : f32
    %29 = vector.broadcast %cst_17 : f32 to vector<1x16x1xf32>
    %30 = arith.mulf %28, %29 : vector<1x16x1xf32>
    %31 = vector.broadcast %30 : vector<1x16x1xf32> to vector<1x16x32xf32>
    %32 = arith.subf %26, %31 : vector<1x16x32xf32>
    %33 = arith.mulf %32, %32 : vector<1x16x32xf32>
    %cst_18 = arith.constant dense<0.000000e+00> : vector<1x16xf32>
    %34 = vector.multi_reduction <add>, %33, %cst_18 [2] : vector<1x16x32xf32> to vector<1x16xf32>
    %35 = vector.shape_cast %34 : vector<1x16xf32> to vector<1x16x1xf32>
    %cst_19 = arith.constant 3.125000e-02 : f32
    %36 = vector.broadcast %cst_19 : f32 to vector<1x16x1xf32>
    %37 = arith.mulf %35, %36 : vector<1x16x1xf32>
    %cst_20 = arith.constant 9.99999974E-6 : f32
    %38 = vector.broadcast %cst_20 : f32 to vector<1x16x1xf32>
    %39 = arith.addf %37, %38 : vector<1x16x1xf32>
    %40 = math.rsqrt %39 : vector<1x16x1xf32>
    %41 = vector.broadcast %40 : vector<1x16x1xf32> to vector<1x16x32xf32>
    %42 = arith.mulf %32, %41 : vector<1x16x32xf32>
    %cst_21 = arith.constant 0.000000e+00 : f32
    %43 = vector.broadcast %cst_21 : f32 to vector<1x16x32xf32>
    %44 = arith.maximumf %42, %43 : vector<1x16x32xf32>
    %45 = arith.addf %2, %44 : vector<1x16x32xf32>
    %cst_22 = arith.constant dense<0.000000e+00> : vector<1x16xf32>
    %46 = vector.multi_reduction <add>, %45, %cst_22 [2] : vector<1x16x32xf32> to vector<1x16xf32>
    %47 = vector.shape_cast %46 : vector<1x16xf32> to vector<1x16x1xf32>
    %cst_23 = arith.constant 3.125000e-02 : f32
    %48 = vector.broadcast %cst_23 : f32 to vector<1x16x1xf32>
    %49 = arith.mulf %47, %48 : vector<1x16x1xf32>
    %50 = vector.broadcast %49 : vector<1x16x1xf32> to vector<1x16x32xf32>
    %51 = arith.subf %45, %50 : vector<1x16x32xf32>
    %52 = arith.mulf %51, %51 : vector<1x16x32xf32>
    %cst_24 = arith.constant dense<0.000000e+00> : vector<1x16xf32>
    %53 = vector.multi_reduction <add>, %52, %cst_24 [2] : vector<1x16x32xf32> to vector<1x16xf32>
    %54 = vector.shape_cast %53 : vector<1x16xf32> to vector<1x16x1xf32>
    %cst_25 = arith.constant 3.125000e-02 : f32
    %55 = vector.broadcast %cst_25 : f32 to vector<1x16x1xf32>
    %56 = arith.mulf %54, %55 : vector<1x16x1xf32>
    %cst_26 = arith.constant 9.99999974E-6 : f32
    %57 = vector.broadcast %cst_26 : f32 to vector<1x16x1xf32>
    %58 = arith.addf %56, %57 : vector<1x16x1xf32>
    %59 = math.rsqrt %58 : vector<1x16x1xf32>
    %60 = vector.broadcast %59 : vector<1x16x1xf32> to vector<1x16x32xf32>
    %61 = arith.mulf %51, %60 : vector<1x16x32xf32>
    %c0_27 = arith.constant 0 : index
    %c0_28 = arith.constant 0 : index
    %c0_29 = arith.constant 0 : index
    %62 = vector.load %arg5[%c0_27, %c0_28, %c0_29] : memref<1x16x32xf32, #tpu.memory_space<vmem>>, vector<1x16x32xf32>
    tpu.vector_store %arg5[%c0_27, %c0_28, %c0_29], %61 {strides = array<i32>} : memref<1x16x32xf32, #tpu.memory_space<vmem>>, vector<1x16x32xf32>,
    %c0_30 = arith.constant 0 : index
    %c0_31 = arith.constant 0 : index
    %c0_32 = arith.constant 0 : index
    %63 = vector.load %arg6[%c0_30, %c0_31, %c0_32] : memref<1x16x16xf32, #tpu.memory_space<vmem>>, vector<1x16x16xf32>
    tpu.vector_store %arg6[%c0_30, %c0_31, %c0_32], %22 {strides = array<i32>} : memref<1x16x16xf32, #tpu.memory_space<vmem>>, vector<1x16x16xf32>,
    return
  }
  func.func @transform_0(%arg0: i32) -> (i32, i32, i32) {
    %c0_i32 = arith.constant 0 : i32
    %c0_i32_0 = arith.constant 0 : i32
    %c0_i32_1 = arith.constant 0 : i32
    return %arg0, %c0_i32, %c0_i32_0 : i32, i32, i32
  }
  func.func @transform_1(%arg0: i32) -> (i32, i32, i32) {
    %c0_i32 = arith.constant 0 : i32
    %c0_i32_0 = arith.constant 0 : i32
    %c0_i32_1 = arith.constant 0 : i32
    return %arg0, %c0_i32, %c0_i32_0 : i32, i32, i32
  }
  func.func @transform_2(%arg0: i32) -> (i32, i32, i32) {
    %c0_i32 = arith.constant 0 : i32
    %c0_i32_0 = arith.constant 0 : i32
    %c0_i32_1 = arith.constant 0 : i32
    return %arg0, %c0_i32, %c0_i32_0 : i32, i32, i32
  }
  func.func @transform_3(%arg0: i32) -> (i32, i32) {
    %c0_i32 = arith.constant 0 : i32
    %c0_i32_0 = arith.constant 0 : i32
    %c0_i32_1 = arith.constant 0 : i32
    return %c0_i32, %c0_i32_0 : i32, i32
  }
  func.func @transform_4(%arg0: i32) -> (i32, i32, i32) {
    %c0_i32 = arith.constant 0 : i32
    %c0_i32_0 = arith.constant 0 : i32
    %c0_i32_1 = arith.constant 0 : i32
    return %arg0, %c0_i32, %c0_i32_0 : i32, i32, i32
  }
  func.func @transform_5(%arg0: i32) -> (i32, i32, i32) {
    %c0_i32 = arith.constant 0 : i32
    %c0_i32_0 = arith.constant 0 : i32
    %c0_i32_1 = arith.constant 0 : i32
    return %arg0, %c0_i32, %c0_i32_0 : i32, i32, i32
  }
}

</mosaic_0001>

<llo_original>
// kernel: tpu_custom_call.1
$region0: #{tpu_custom_call.1}
  #allocation0 [shape = 'u32[]', space=smem, size = 0x4, offset = 0x4, fixed_abs, tag = 'smem constant byte address 0x4 - core index']
  #allocation1 [shape = 'u32[72,128]{1,0:T(1,128)}', space=vmem, size = 0x9000, scoped, tag = 'internal scratch']
  %s0 = inlined_call_operand.hbm [shape: f32[2,1,16], index: 0, kind: input, shape index: {}]
  %s1 = inlined_call_operand.hbm [shape: f32[2,16,16], index: 1, kind: input, shape index: {}]
  %s2 = inlined_call_operand.hbm [shape: f32[2,16,32], index: 2, kind: input, shape index: {}]
  %s3 = inlined_call_operand.hbm [shape: f32[32,32], index: 3, kind: input, shape index: {}]
  %s4 = inlined_call_operand.hbm [shape: f32[2,16,32], index: 4, kind: output, shape index: {0}]
  %s5 = inlined_call_operand.hbm [shape: f32[2,16,16], index: 5, kind: output, shape index: {1}]
  %6 = xla_tuple %s4, %s5
  %s7 = sld [smem:[#allocation0]]
  $region73: #{tpu_custom_call.1} parent=0
    _
  %s9 = ssub.s32 1, %s7
  %s10 = scalar_select 0, %s9, %s7
  $region1: #{tpu_custom_call.1} parent=0
    #allocation2 [shape = 'u8[1024]{0}', space=vmem, size = 0x400, scoped, tag = 'input window, operand 0']
    #allocation3 [shape = 's32[2]{0}', space=sflag, size = 0x8, scoped, tag = 'scoped memory for tpu_custom_call.1']
    #allocation4 [shape = 's32[2]{0}', space=sflag, size = 0x8, scoped, tag = 'scoped memory for tpu_custom_call.1']
    #allocation5 [shape = 'u8[16384]{0}', space=vmem, size = 0x4000, scoped, tag = 'input window, operand 1']
    #allocation6 [shape = 's32[2]{0}', space=sflag, size = 0x8, scoped, tag = 'scoped memory for tpu_custom_call.1']
    #allocation7 [shape = 'u8[16384]{0}', space=vmem, size = 0x4000, scoped, tag = 'input window, operand 2']
    #allocation8 [shape = 'u8[16384]{0}', space=vmem, size = 0x4000, scoped, tag = 'input window, operand 3, single buffered']
    #allocation9 [shape = 's32[1]{0}', space=sflag, size = 0x4, scoped, tag = 'scoped memory for tpu_custom_call.1']
    #allocation10 [shape = 'u8[16384]{0}', space=vmem, size = 0x4000, scoped, tag = 'output window, operand 0']
    #allocation11 [shape = 'u8[16384]{0}', space=vmem, size = 0x4000, scoped, tag = 'output window, operand 1']
    #allocation12 [shape = 's32[2]{0}', space=sflag, size = 0x8, scoped, tag = 'scoped memory for tpu_custom_call.1']
    %11 = vsyncpa [#allocation3], 0
    %s12 = scalar_lea.sflag [#allocation3], 1
    %13 = vsyncpa %s12, 0
    %14 = vsyncpa [#allocation6], 0
    %s15 = scalar_lea.sflag [#allocation6], 1
    %16 = vsyncpa %s15, 0
    %17 = vsyncpa [#allocation9], 0
    %18 = vsyncpa [#allocation4], 0
    %s19 = scalar_lea.sflag [#allocation4], 1
    %20 = vsyncpa %s19, 0
    %21 = vsyncpa [#allocation12], 0
    %s22 = scalar_lea.sflag [#allocation12], 1
    %23 = vsyncpa %s22, 0
    loop: start=0, step=1, limit=4
    $region2: #{tpu_custom_call.1} parent=1 // loop_pre_header
      _
    $region3: #{tpu_custom_call.1} parent=1 // loop_header
      %s25 = sphi 0, %s29
      %p26 = scmp.ge.s32.totalorder %s25, 4
      %s35 = sphi 0, %s37
      %s38 = sphi 0, %s35
      %s39 = sphi 0, %s38
      %s55 = sphi 0, %s39
      %s61 = sphi 0, %s63
      %s64 = sphi 0, %s61
      %s65 = sphi 0, %s64
      %s81 = sphi 0, %s65
      %s87 = sphi 0, %s89
      %s90 = sphi 0, %s87
      %s91 = sphi 0, %s90
      %s107 = sphi 0, %s91
      %s111 = sphi 0, %s111
      %s113 = sphi 0, %s111
      %s114 = sphi 0, %s113
      %s128 = sphi 0, %s114
      %s134 = sphi 0, %s136
      %s137 = sphi 0, %s134
      %s138 = sphi 0, %s137
      %s154 = sphi 0, %s138
      %s160 = sphi 0, %s162
      %s163 = sphi 0, %s160
      %s164 = sphi 0, %s163
      %s180 = sphi 0, %s164
    $region4: #{tpu_custom_call.1} parent=1 // loop_header_branch
      %28 = sbr.rel (%p26) target = $region8
    $region5: #{tpu_custom_call.1} parent=1 // loop_body
      %s30 = ssub.s32 %s25, 1
      %s31 = ssub.s32 %s25, 2
      %s32 = sadd.s32 %s25, 1
      %s33 = ssub.s32 %s25, %s32
      %p34 = scmp.eq.s32.totalorder %s33, 0
      %s36 = sadd.s32 %s35, 1
      %s37 = scalar_select %p34, %s35, %s36
      %p40 = pneg %p34
      %p41 = scmp.eq.s32.totalorder %s25, 1
      %p42 = por %p40, %p41
      %p43 = scmp.ne.s32.totalorder %s35, %s38
      %p44 = scmp.eq.s32.totalorder %s25, 0
      %p45 = por %p43, %p44
      %p46 = scmp.ne.s32.totalorder %s35, %s38
      %p47 = scmp.eq.s32.totalorder %s30, 1
      %p48 = por %p46, %p47
      %p49 = scmp.ne.s32.totalorder %s38, %s39
      %p50 = scmp.eq.s32.totalorder %s30, 0
      %p51 = por %p49, %p50
      %p52 = scmp.ne.s32.totalorder %s38, %s39
      %p53 = scmp.eq.s32.totalorder %s31, 1
      %p54 = por %p52, %p53
      %p56 = scmp.ne.s32.totalorder %s39, %s55
      %p57 = scmp.eq.s32.totalorder %s31, 0
      %p58 = por %p56, %p57
      %s59 = ssub.s32 %s25, %s32
      %p60 = scmp.eq.s32.totalorder %s59, 0
      %s62 = sadd.s32 %s61, 1
      %s63 = scalar_select %p60, %s61, %s62
      %p66 = pneg %p60
      %p67 = scmp.eq.s32.totalorder %s25, 1
      %p68 = por %p66, %p67
      %p69 = scmp.ne.s32.totalorder %s61, %s64
      %p70 = scmp.eq.s32.totalorder %s25, 0
      %p71 = por %p69, %p70
      %p72 = scmp.ne.s32.totalorder %s61, %s64
      %p73 = scmp.eq.s32.totalorder %s30, 1
      %p74 = por %p72, %p73
      %p75 = scmp.ne.s32.totalorder %s64, %s65
      %p76 = scmp.eq.s32.totalorder %s30, 0
      %p77 = por %p75, %p76
      %p78 = scmp.ne.s32.totalorder %s64, %s65
      %p79 = scmp.eq.s32.totalorder %s31, 1
      %p80 = por %p78, %p79
      %p82 = scmp.ne.s32.totalorder %s65, %s81
      %p83 = scmp.eq.s32.totalorder %s31, 0
      %p84 = por %p82, %p83
      %s85 = ssub.s32 %s25, %s32
      %p86 = scmp.eq.s32.totalorder %s85, 0
      %s88 = sadd.s32 %s87, 1
      %s89 = scalar_select %p86, %s87, %s88
      %p92 = pneg %p86
      %p93 = scmp.eq.s32.totalorder %s25, 1
      %p94 = por %p92, %p93
      %p95 = scmp.ne.s32.totalorder %s87, %s90
      %p96 = scmp.eq.s32.totalorder %s25, 0
      %p97 = por %p95, %p96
      %p98 = scmp.ne.s32.totalorder %s87, %s90
      %p99 = scmp.eq.s32.totalorder %s30, 1
      %p100 = por %p98, %p99
      %p101 = scmp.ne.s32.totalorder %s90, %s91
      %p102 = scmp.eq.s32.totalorder %s30, 0
      %p103 = por %p101, %p102
      %p104 = scmp.ne.s32.totalorder %s90, %s91
      %p105 = scmp.eq.s32.totalorder %s31, 1
      %p106 = por %p104, %p105
      %p108 = scmp.ne.s32.totalorder %s91, %s107
      %p109 = scmp.eq.s32.totalorder %s31, 0
      %p110 = por %p108, %p109
      %s112 = sadd.s32 %s111, 1
      %p115 = scmp.eq.s32.totalorder %s25, 1
      %p116 = scmp.ne.s32.totalorder %s111, %s113
      %p117 = scmp.eq.s32.totalorder %s25, 0
      %p118 = por %p116, %p117
      %p119 = scmp.ne.s32.totalorder %s111, %s113
      %p120 = scmp.eq.s32.totalorder %s30, 1
      %p121 = por %p119, %p120
      %p122 = scmp.ne.s32.totalorder %s113, %s114
      %p123 = scmp.eq.s32.totalorder %s30, 0
      %p124 = por %p122, %p123
      %p125 = scmp.ne.s32.totalorder %s113, %s114
      %p126 = scmp.eq.s32.totalorder %s31, 1
      %p127 = por %p125, %p126
      %p129 = scmp.ne.s32.totalorder %s114, %s128
      %p130 = scmp.eq.s32.totalorder %s31, 0
      %p131 = por %p129, %p130
      %s132 = ssub.s32 %s25, %s32
      %p133 = scmp.eq.s32.totalorder %s132, 0
      %s135 = sadd.s32 %s134, 1
      %s136 = scalar_select %p133, %s134, %s135
      %p139 = pneg %p133
      %p140 = scmp.eq.s32.totalorder %s25, 1
      %p141 = por %p139, %p140
      %p142 = scmp.ne.s32.totalorder %s134, %s137
      %p143 = scmp.eq.s32.totalorder %s25, 0
      %p144 = por %p142, %p143
      %p145 = scmp.ne.s32.totalorder %s134, %s137
      %p146 = scmp.eq.s32.totalorder %s30, 1
      %p147 = por %p145, %p146
      %p148 = scmp.ne.s32.totalorder %s137, %s138
      %p149 = scmp.eq.s32.totalorder %s30, 0
      %p150 = por %p148, %p149
      %p151 = scmp.ne.s32.totalorder %s137, %s138
      %p152 = scmp.eq.s32.totalorder %s31, 1
      %p153 = por %p151, %p152
      %p155 = scmp.ne.s32.totalorder %s138, %s154
      %p156 = scmp.eq.s32.totalorder %s31, 0
      %p157 = por %p155, %p156
      %s158 = ssub.s32 %s25, %s32
      %p159 = scmp.eq.s32.totalorder %s158, 0
      %s161 = sadd.s32 %s160, 1
      %s162 = scalar_select %p159, %s160, %s161
      %p165 = pneg %p159
      %p166 = scmp.eq.s32.totalorder %s25, 1
      %p167 = por %p165, %p166
      %p168 = scmp.ne.s32.totalorder %s160, %s163
      %p169 = scmp.eq.s32.totalorder %s25, 0
      %p170 = por %p168, %p169
      %p171 = scmp.ne.s32.totalorder %s160, %s163
      %p172 = scmp.eq.s32.totalorder %s30, 1
      %p173 = por %p171, %p172
      %p174 = scmp.ne.s32.totalorder %s163, %s164
      %p175 = scmp.eq.s32.totalorder %s30, 0
      %p176 = por %p174, %p175
      %p177 = scmp.ne.s32.totalorder %s163, %s164
      %p178 = scmp.eq.s32.totalorder %s31, 1
      %p179 = por %p177, %p178
      %p181 = scmp.ne.s32.totalorder %s164, %s180
      %p182 = scmp.eq.s32.totalorder %s31, 0
      %p183 = por %p181, %p182
      %p184 = scmp.le.s32.totalorder 1, %s25
      %p185 = scmp.lt.s32.totalorder %s25, 3
      %p186 = pnand %p184, %p185
      %p187 = pneg %p186
      // Predicated region
      $region9: #{tpu_custom_call.1} parent=5 // pred_check
        _
      $region10: #{tpu_custom_call.1} parent=5 // pred_check_branch
        %189 = sbr.rel (%p186) target = $region12
      $region11: #{tpu_custom_call.1} parent=5 // pred_region
        %s190 = ssub.s32 %s25, 1
        // Predicated region
        $region13: #{tpu_custom_call.1} parent=11 // pred_check
          %p191 = pneg %p124
        $region14: #{tpu_custom_call.1} parent=11 // pred_check_branch
          %193 = sbr.rel (%p191) target = $region16
        $region15: #{tpu_custom_call.1} parent=11 // pred_region
          %195 = vsyncadd [#allocation9], 0
          %s196 = sshll.u32 %s3, 4
          %s197 = int_to_ptr.hbm [resolvable:$true] %s196
          %s198 = sshll.u32 [#allocation8], 4
          %s199 = int_to_ptr.vmem [resolvable:$true] %s198
          %204 = dma.hbm_to_vmem [thread:$0]  %s197, 512, %s199, [#allocation9], 128, 128, 8
        $region16: #{tpu_custom_call.1} parent=11 // pred_fallthru
          _
      $region12: #{tpu_custom_call.1} parent=5 // pred_fallthru
        _
      %p205 = scmp.lt.s32.totalorder %s25, 2
      // Predicated region
      $region17: #{tpu_custom_call.1} parent=5 // pred_check
        %p206 = pneg %p205
      $region18: #{tpu_custom_call.1} parent=5 // pred_check_branch
        %208 = sbr.rel (%p206) target = $region20
      $region19: #{tpu_custom_call.1} parent=5 // pred_region
        // Predicated region
        $region21: #{tpu_custom_call.1} parent=19 // pred_check
          %p209 = pneg %p45
        $region22: #{tpu_custom_call.1} parent=19 // pred_check_branch
          %211 = sbr.rel (%p209) target = $region24
        $region23: #{tpu_custom_call.1} parent=19 // pred_region
          %s212 = sand.u32 %s35, 1
          %s213 = scalar_lea.sflag [#allocation3], %s212
          %s214 = sand.u32 %s35, 1
          %s215 = scalar_lea.vmem [#allocation2], %s214
          %217 = vsyncadd %s213, 0
          %s218 = scalar_lea.hbm %s0, %s25
          %s220 = sshll.u32 %s218, 4
          %s221 = int_to_ptr.hbm [resolvable:$true] %s220
          %s222 = sshll.u32 %s215, 4
          %s223 = int_to_ptr.vmem [resolvable:$true] %s222
          %225 = dma.hbm_to_vmem [thread:$0]  %s221, 16, %s223, %s213
        $region24: #{tpu_custom_call.1} parent=19 // pred_fallthru
          _
        // Predicated region
        $region25: #{tpu_custom_call.1} parent=19 // pred_check
          %p226 = pneg %p71
        $region26: #{tpu_custom_call.1} parent=19 // pred_check_branch
          %228 = sbr.rel (%p226) target = $region28
        $region27: #{tpu_custom_call.1} parent=19 // pred_region
          %s229 = sand.u32 %s25, 1
          %s230 = scalar_lea.sflag [#allocation6], %s229
          %s231 = sand.u32 %s61, 1
          %s232 = smul.addr %s231, 16
          %s233 = scalar_lea.vmem [#allocation5], %s232
          %235 = vsyncadd %s230, 0
          %s236 = smul.addr %s25, 2
          %s237 = smul.addr %s236, 8
          %s238 = scalar_lea.hbm %s1, %s237
          %s239 = sshll.u32 %s238, 4
          %s240 = int_to_ptr.hbm [resolvable:$true] %s239
          %s241 = sshll.u32 %s233, 4
          %s242 = int_to_ptr.vmem [resolvable:$true] %s241
          %247 = dma.hbm_to_vmem [thread:$0]  %s240, 256, %s242, %s230, 128, 128, 8
        $region28: #{tpu_custom_call.1} parent=19 // pred_fallthru
          _
        // Predicated region
        $region29: #{tpu_custom_call.1} parent=19 // pred_check
          %p248 = pneg %p97
        $region30: #{tpu_custom_call.1} parent=19 // pred_check_branch
          %250 = sbr.rel (%p248) target = $region32
        $region31: #{tpu_custom_call.1} parent=19 // pred_region
          %s251 = sand.u32 %s25, 1
          %s252 = scalar_lea.sflag [#allocation6], %s251
          %s253 = sand.u32 %s87, 1
          %s254 = smul.addr %s253, 16
          %s255 = scalar_lea.vmem [#allocation7], %s254
          %257 = vsyncadd %s252, 0
          %s258 = smul.addr %s25, 2
          %s259 = smul.addr %s258, 8
          %s260 = scalar_lea.hbm %s2, %s259
          %s261 = sshll.u32 %s260, 4
          %s262 = int_to_ptr.hbm [resolvable:$true] %s261
          %s263 = sshll.u32 %s255, 4
          %s264 = int_to_ptr.vmem [resolvable:$true] %s263
          %269 = dma.hbm_to_vmem [thread:$0]  %s262, 256, %s264, %s252, 128, 128, 8
        $region32: #{tpu_custom_call.1} parent=19 // pred_fallthru
          _
      $region20: #{tpu_custom_call.1} parent=5 // pred_fallthru
        _
      %p270 = scmp.le.s32.totalorder 1, %s25
      %p271 = scmp.lt.s32.totalorder %s25, 3
      %p272 = pnand %p270, %p271
      %p273 = pneg %p272
      // Predicated region
      $region33: #{tpu_custom_call.1} parent=5 // pred_check
        _
      $region34: #{tpu_custom_call.1} parent=5 // pred_check_branch
        %275 = sbr.rel (%p272) target = $region36
      $region35: #{tpu_custom_call.1} parent=5 // pred_region
        %s276 = ssub.s32 %s25, 1
        %s277 = sand.u32 %s38, 1
        %s278 = scalar_lea.sflag [#allocation3], %s277
        %s279 = sand.u32 %s38, 1
        %s280 = scalar_lea.vmem [#allocation2], %s279
        // Predicated region
        $region37: #{tpu_custom_call.1} parent=35 // pred_check
          %p281 = pneg %p51
        $region38: #{tpu_custom_call.1} parent=35 // pred_check_branch
          %283 = sbr.rel (%p281) target = $region40
        $region39: #{tpu_custom_call.1} parent=35 // pred_region
          %285 = dma.done %s278, 16
        $region40: #{tpu_custom_call.1} parent=35 // pred_fallthru
          _
        %s286 = sand.u32 %s30, 1
        %s287 = scalar_lea.sflag [#allocation6], %s286
        %s288 = sand.u32 %s64, 1
        %s289 = smul.addr %s288, 16
        %s290 = scalar_lea.vmem [#allocation5], %s289
        // Predicated region
        $region41: #{tpu_custom_call.1} parent=35 // pred_check
          %p291 = pneg %p77
        $region42: #{tpu_custom_call.1} parent=35 // pred_check_branch
          %293 = sbr.rel (%p291) target = $region44
        $region43: #{tpu_custom_call.1} parent=35 // pred_region
          %295 = dma.done %s287, 256
        $region44: #{tpu_custom_call.1} parent=35 // pred_fallthru
          _
        %s296 = sand.u32 %s30, 1
        %s297 = scalar_lea.sflag [#allocation6], %s296
        %s298 = sand.u32 %s90, 1
        %s299 = smul.addr %s298, 16
        %s300 = scalar_lea.vmem [#allocation7], %s299
        // Predicated region
        $region45: #{tpu_custom_call.1} parent=35 // pred_check
          %p301 = pneg %p103
        $region46: #{tpu_custom_call.1} parent=35 // pred_check_branch
          %303 = sbr.rel (%p301) target = $region48
        $region47: #{tpu_custom_call.1} parent=35 // pred_region
          %305 = dma.done %s297, 256
        $region48: #{tpu_custom_call.1} parent=35 // pred_fallthru
          _
        // Predicated region
        $region49: #{tpu_custom_call.1} parent=35 // pred_check
          %p306 = pneg %p124
        $region50: #{tpu_custom_call.1} parent=35 // pred_check_branch
          %308 = sbr.rel (%p306) target = $region52
        $region51: #{tpu_custom_call.1} parent=35 // pred_region
          %310 = dma.done [#allocation9], 512
        $region52: #{tpu_custom_call.1} parent=35 // pred_fallthru
          _
        %s311 = sand.u32 %s38, 1
        %s312 = scalar_lea.sflag [#allocation3], %s311
        %s313 = sand.u32 %s38, 1
        %s314 = scalar_lea.vmem [#allocation2], %s313
        %p315 = pneg %p51
        %p316 = pneg %p48
        %s317 = sand.u32 %s30, 1
        %s318 = scalar_lea.sflag [#allocation6], %s317
        %s319 = sand.u32 %s64, 1
        %s320 = smul.addr %s319, 16
        %s321 = scalar_lea.vmem [#allocation5], %s320
        %p322 = pneg %p77
        %p323 = pneg %p74
        %s324 = sand.u32 %s30, 1
        %s325 = scalar_lea.sflag [#allocation6], %s324
        %s326 = sand.u32 %s90, 1
        %s327 = smul.addr %s326, 16
        %s328 = scalar_lea.vmem [#allocation7], %s327
        %p329 = pneg %p103
        %p330 = pneg %p100
        %p331 = pneg %p124
        %p332 = pneg %p121
        %p333 = pneg %p150
        %p334 = pneg %p147
        %s335 = sand.u32 %s137, 1
        %s336 = scalar_lea.sflag [#allocation4], %s335
        %s337 = sand.u32 %s137, 1
        %s338 = smul.addr %s337, 16
        %s339 = scalar_lea.vmem [#allocation10], %s338
        %p340 = pneg %p176
        %p341 = pneg %p173
        %s342 = sand.u32 %s163, 1
        %s343 = scalar_lea.sflag [#allocation12], %s342
        %s344 = sand.u32 %s163, 1
        %s345 = smul.addr %s344, 16
        %s346 = scalar_lea.vmem [#allocation11], %s345
        %v347 = vld [vmem:[%s280] sm:$0x1]
        %v348 = vld [vmem:[%s290] sm:$0xff]
        %v349 = vld [vmem:[%s290 + $0x8] sm:$0xff]
        %v350 = vld [vmem:[%s300] sm:$0xff]
        %v351 = vld [vmem:[%s300 + $0x8] sm:$0xff]
        %v352 = vld [vmem:[#allocation8] sm:$0xff]
        %v353 = vld [vmem:[#allocation8 + $0x8] sm:$0xff]
        %v354 = vld [vmem:[#allocation8 + $0x10] sm:$0xff]
        %v355 = vld [vmem:[#allocation8 + $0x18] sm:$0xff]
        %vm356 = vcmp.eq.f32.partialorder %v347, 0.0
        %v357 = vsel %vm356, 1, 0
        %v358 = vperm.slane %v357, 0
        %vm359 = vcmp.eq.s32.totalorder %v358, 1
        %v360 = vsel %vm359, -1e+10, %v348
        %v361 = vsel %vm359, -1e+10, %v349
        %vm362 = vcmask 130048
        %v363 = vsel %vm362, %v360, -inf
        %364 = vmax.xlane.f32.xlu0 %v363
        %v365 = vpop.xlane.xlu0 %364
        %v366 = vsel %vm362, %v361, -inf
        %367 = vmax.xlane.f32.xlu0 %v366
        %v368 = vpop.xlane.xlu0 %367
        %v369 = vsub.f32 %v360, %v365
        %v370 = vsub.f32 %v361, %v368
        %v371 = vmul.f32 %v369, 1.442695
        %v372 = vpow.pop %v371
        %v373 = vmul.f32 %v370, 1.442695
        %v374 = vpow.pop %v373
        %v375 = vsel %vm362, %v372, 0.0
        %376 = vadd.xlane.f32.xlu0 %v375
        %v377 = vpop.xlane.xlu0 %376
        %v378 = vsel %vm362, %v374, 0.0
        %379 = vadd.xlane.f32.xlu0 %v378
        %v380 = vpop.xlane.xlu0 %379
        %v381 = vrcp.pop %v377
        %v382 = vrcp.pop %v380
        %v383 = vmul.f32 %v372, %v381
        %v384 = vmul.f32 %v374, %v382
        %vm385 = vcmp.ne.f32.partialorder %v383, %v383
        %vm386 = vcmp.ne.f32.partialorder %v384, %v384
        %v387 = vsel %vm385, 0.0, %v383
        %v388 = vsel %vm386, 0.0, %v384
        %vm389 = vcmask 261120
        %v391 = vsel %vm389, %v350, 0
        %v394 = vsel %vm389, %v351, 0
        %396 = vmatpush.msra.mxu0 0.0
        %397 = vmatpush.msra.mxu0 0.0
        %398 = vmatpush.msra.mxu0 0.0
        %399 = vmatpush.msra.mxu0 0.0
        %400 = vmatpush.msra.mxu0 0.0
        %401 = vmatpush.msra.mxu0 0.0
        %402 = vmatpush.msra.mxu0 0.0
        %403 = vmatpush.msra.mxu0 0.0
        %404 = vmatpush.msra.mxu0 0.0
        %405 = vmatpush.msra.mxu0 0.0
        %406 = vmatpush.msra.mxu0 0.0
        %407 = vmatpush.msra.mxu0 0.0
        %408 = vmatpush.msra.mxu0 %v355
        %409 = vmatpush.msra.mxu0 %v354
        %410 = vmatpush.msra.mxu0 %v353
        %411 = vmatpush.msra.mxu0 %v352
        %412 = vmatmul.f32.gmra.mxu0 %v391
        %v413 = vpop.f32.mrf.mxu0
        %v414 = vadd.f32 0.0, %v413
        %415 = vmatmul.f32.gmra.mxu0 %v394
        %v416 = vpop.f32.mrf.mxu0
        %v417 = vadd.f32 0.0, %v416
        %418 = vdwg.mxu0
        %v420 = vsel %vm362, %v387, 0
        %v423 = vsel %vm362, %v388, 0
        %425 = vmatpush.msra.mxu0 0.0
        %426 = vmatpush.msra.mxu0 0.0
        %427 = vmatpush.msra.mxu0 0.0
        %428 = vmatpush.msra.mxu0 0.0
        %429 = vmatpush.msra.mxu0 0.0
        %430 = vmatpush.msra.mxu0 0.0
        %431 = vmatpush.msra.mxu0 0.0
        %432 = vmatpush.msra.mxu0 0.0
        %433 = vmatpush.msra.mxu0 0.0
        %434 = vmatpush.msra.mxu0 0.0
        %435 = vmatpush.msra.mxu0 0.0
        %436 = vmatpush.msra.mxu0 0.0
        %437 = vmatpush.msra.mxu0 0.0
        %438 = vmatpush.msra.mxu0 0.0
        %439 = vmatpush.msra.mxu0 %v417
        %440 = vmatpush.msra.mxu0 %v414
        %441 = vmatmul.f32.gmra.mxu0 %v420
        %v442 = vpop.f32.mrf.mxu0
        %v443 = vadd.f32 0.0, %v442
        %444 = vmatmul.f32.gmra.mxu0 %v423
        %v445 = vpop.f32.mrf.mxu0
        %v446 = vadd.f32 0.0, %v445
        %447 = vdwg.mxu0
        %v448 = vsel %vm389, %v443, 0.0
        %449 = vadd.xlane.f32.xlu0 %v448
        %v450 = vpop.xlane.xlu0 %449
        %v451 = vsel %vm389, %v446, 0.0
        %452 = vadd.xlane.f32.xlu0 %v451
        %v453 = vpop.xlane.xlu0 %452
        %v454 = vmul.f32 %v450, 0.03125
        %v455 = vmul.f32 %v453, 0.03125
        %v456 = vsub.f32 %v443, %v454
        %v457 = vsub.f32 %v446, %v455
        %v458 = vmul.f32 %v456, %v456
        %v459 = vmul.f32 %v457, %v457
        %v460 = vsel %vm389, %v458, 0.0
        %461 = vadd.xlane.f32.xlu0 %v460
        %v462 = vpop.xlane.xlu0 %461
        %v463 = vsel %vm389, %v459, 0.0
        %464 = vadd.xlane.f32.xlu0 %v463
        %v465 = vpop.xlane.xlu0 %464
        %v466 = vmul.f32 %v462, 0.03125
        %v467 = vmul.f32 %v465, 0.03125
        %v468 = vadd.f32 %v466, 1e-05
        %v469 = vadd.f32 %v467, 1e-05
        %v470 = vrsqrt.pop %v468
        %v471 = vmul.f32 %v470, %v468
        %v472 = vmul.f32 %v471, %v470
        %v473 = vmul.f32 0.5, %v472
        %v474 = vsub.f32 1.5, %v473
        %v475 = vmul.f32 %v470, %v474
        %vm476 = vweird.f32 %v468
        %vm477 = vweird.f32 %v470
        %vm478 = vmor %vm476, %vm477
        %v479 = vsel %vm478, %v470, %v475
        %v480 = vrsqrt.pop %v469
        %v481 = vmul.f32 %v480, %v469
        %v482 = vmul.f32 %v481, %v480
        %v483 = vmul.f32 0.5, %v482
        %v484 = vsub.f32 1.5, %v483
        %v485 = vmul.f32 %v480, %v484
        %vm486 = vweird.f32 %v469
        %vm487 = vweird.f32 %v480
        %vm488 = vmor %vm486, %vm487
        %v489 = vsel %vm488, %v480, %v485
        %v490 = vmul.f32 %v456, %v479
        %v491 = vmul.f32 %v457, %v489
        %v492 = vmax.f32 %v490, 0.0
        %v493 = vmax.f32 %v491, 0.0
        %v494 = vadd.f32 %v350, %v492
        %v495 = vadd.f32 %v351, %v493
        %v496 = vsel %vm389, %v494, 0.0
        %497 = vadd.xlane.f32.xlu0 %v496
        %v498 = vpop.xlane.xlu0 %497
        %v499 = vsel %vm389, %v495, 0.0
        %500 = vadd.xlane.f32.xlu0 %v499
        %v501 = vpop.xlane.xlu0 %500
        %v502 = vmul.f32 %v498, 0.03125
        %v503 = vmul.f32 %v501, 0.03125
        %v504 = vsub.f32 %v494, %v502
        %v505 = vsub.f32 %v495, %v503
        %v506 = vmul.f32 %v504, %v504
        %v507 = vmul.f32 %v505, %v505
        %v508 = vsel %vm389, %v506, 0.0
        %509 = vadd.xlane.f32.xlu0 %v508
        %v510 = vpop.xlane.xlu0 %509
        %v511 = vsel %vm389, %v507, 0.0
        %512 = vadd.xlane.f32.xlu0 %v511
        %v513 = vpop.xlane.xlu0 %512
        %v514 = vmul.f32 %v510, 0.03125
        %v515 = vmul.f32 %v513, 0.03125
        %v516 = vadd.f32 %v514, 1e-05
        %v517 = vadd.f32 %v515, 1e-05
        %v518 = vrsqrt.pop %v516
        %v519 = vmul.f32 %v518, %v516
        %v520 = vmul.f32 %v519, %v518
        %v521 = vmul.f32 0.5, %v520
        %v522 = vsub.f32 1.5, %v521
        %v523 = vmul.f32 %v518, %v522
        %vm524 = vweird.f32 %v516
        %vm525 = vweird.f32 %v518
        %vm526 = vmor %vm524, %vm525
        %v527 = vsel %vm526, %v518, %v523
        %v528 = vrsqrt.pop %v517
        %v529 = vmul.f32 %v528, %v517
        %v530 = vmul.f32 %v529, %v528
        %v531 = vmul.f32 0.5, %v530
        %v532 = vsub.f32 1.5, %v531
        %v533 = vmul.f32 %v528, %v532
        %vm534 = vweird.f32 %v517
        %vm535 = vweird.f32 %v528
        %vm536 = vmor %vm534, %vm535
        %v537 = vsel %vm536, %v528, %v533
        %v538 = vmul.f32 %v504, %v527
        %v539 = vmul.f32 %v505, %v537
        %540 = vst.msk [vmem:[%s339] sm:$0xff] %vm389, %v538
        %541 = vst.msk [vmem:[%s339 + $0x8] sm:$0xff] %vm389, %v539
        %542 = vst.msk [vmem:[%s346] sm:$0xff] %vm362, %v387
        %543 = vst.msk [vmem:[%s346 + $0x8] sm:$0xff] %vm362, %v388
        %s544 = sand.u32 %s137, 1
        %s545 = scalar_lea.sflag [#allocation4], %s544
        %s546 = sand.u32 %s137, 1
        %s547 = smul.addr %s546, 16
        %s548 = scalar_lea.vmem [#allocation10], %s547
        %s549 = sand.u32 %s163, 1
        %s550 = scalar_lea.sflag [#allocation12], %s549
        %s551 = sand.u32 %s163, 1
        %s552 = smul.addr %s551, 16
        %s553 = scalar_lea.vmem [#allocation11], %s552
        // Predicated region
        $region53: #{tpu_custom_call.1} parent=35 // pred_check
          %p554 = pneg %p147
        $region54: #{tpu_custom_call.1} parent=35 // pred_check_branch
          %556 = sbr.rel (%p554) target = $region56
        $region55: #{tpu_custom_call.1} parent=35 // pred_region
          %558 = vsyncadd %s545, 0
          %s559 = smul.addr %s30, 2
          %s560 = smul.addr %s559, 8
          %s561 = scalar_lea.hbm %s4, %s560
          %s562 = sshll.u32 %s548, 4
          %s563 = int_to_ptr.vmem [resolvable:$true] %s562
          %s564 = sshll.u32 %s561, 4
          %s565 = int_to_ptr.hbm [resolvable:$true] %s564
          %570 = dma.vmem_to_hbm [thread:$0]  %s563, 256, %s565, %s545, 128, 128, 8
        $region56: #{tpu_custom_call.1} parent=35 // pred_fallthru
          _
        // Predicated region
        $region57: #{tpu_custom_call.1} parent=35 // pred_check
          %p571 = pneg %p173
        $region58: #{tpu_custom_call.1} parent=35 // pred_check_branch
          %573 = sbr.rel (%p571) target = $region60
        $region59: #{tpu_custom_call.1} parent=35 // pred_region
          %575 = vsyncadd %s550, 0
          %s576 = smul.addr %s30, 2
          %s577 = smul.addr %s576, 8
          %s578 = scalar_lea.hbm %s5, %s577
          %s579 = sshll.u32 %s553, 4
          %s580 = int_to_ptr.vmem [resolvable:$true] %s579
          %s581 = sshll.u32 %s578, 4
          %s582 = int_to_ptr.hbm [resolvable:$true] %s581
          %587 = dma.vmem_to_hbm [thread:$0]  %s580, 256, %s582, %s550, 128, 128, 8
        $region60: #{tpu_custom_call.1} parent=35 // pred_fallthru
          _
      $region36: #{tpu_custom_call.1} parent=5 // pred_fallthru
        _
      %p588 = scmp.le.s32.totalorder 2, %s25
      // Predicated region
      $region61: #{tpu_custom_call.1} parent=5 // pred_check
        %p589 = pneg %p588
      $region62: #{tpu_custom_call.1} parent=5 // pred_check_branch
        %591 = sbr.rel (%p589) target = $region64
      $region63: #{tpu_custom_call.1} parent=5 // pred_region
        %s592 = ssub.s32 %s25, 2
        // Predicated region
        $region65: #{tpu_custom_call.1} parent=63 // pred_check
          %p593 = pneg %p153
        $region66: #{tpu_custom_call.1} parent=63 // pred_check_branch
          %595 = sbr.rel (%p593) target = $region68
        $region67: #{tpu_custom_call.1} parent=63 // pred_region
          %s596 = sand.u32 %s138, 1
          %s597 = scalar_lea.sflag [#allocation4], %s596
          %s598 = sand.u32 %s138, 1
          %s599 = smul.addr %s598, 16
          %s600 = scalar_lea.vmem [#allocation10], %s599
          %602 = dma.done %s597, 256
        $region68: #{tpu_custom_call.1} parent=63 // pred_fallthru
          _
        // Predicated region
        $region69: #{tpu_custom_call.1} parent=63 // pred_check
          %p603 = pneg %p179
        $region70: #{tpu_custom_call.1} parent=63 // pred_check_branch
          %605 = sbr.rel (%p603) target = $region72
        $region71: #{tpu_custom_call.1} parent=63 // pred_region
          %s606 = sand.u32 %s164, 1
          %s607 = scalar_lea.sflag [#allocation12], %s606
          %s608 = sand.u32 %s164, 1
          %s609 = smul.addr %s608, 16
          %s610 = scalar_lea.vmem [#allocation11], %s609
          %612 = dma.done %s607, 256
        $region72: #{tpu_custom_call.1} parent=63 // pred_fallthru
          _
      $region64: #{tpu_custom_call.1} parent=5 // pred_fallthru
        _
    $region6: #{tpu_custom_call.1} parent=1 // loop_footer
      %s29 = sadd.s32 1, %s25
    $region7: #{tpu_custom_call.1} parent=1 // loop_footer_branch
      %24 = sbr.rel target = $region3
    $region8: #{tpu_custom_call.1} parent=1 // loop_exit
      _
    %613 = vsyncpa [#allocation3], 1
    %s614 = scalar_lea.sflag [#allocation3], 1
    %615 = vsyncpa %s614, 1
    %616 = vsyncpa [#allocation6], 1
    %s617 = scalar_lea.sflag [#allocation6], 1
    %618 = vsyncpa %s617, 1
    %619 = vsyncpa [#allocation9], 1
    %620 = vsyncpa [#allocation4], 1
    %s621 = scalar_lea.sflag [#allocation4], 1
    %622 = vsyncpa %s621, 1
    %623 = vsyncpa [#allocation12], 1
    %s624 = scalar_lea.sflag [#allocation12], 1
    %625 = vsyncpa %s624, 1

</llo_original>
